<compile_context>
chip_gen: v7x
topology: tpu7x:2x2x1
jax: 0.10.0
libtpu: 0.0.40
codegen_flags: <defaults>
</compile_context>

<pallas_src>
import jax
import jax.numpy as jnp
from jax import lax
from jax.experimental import pallas as pl
from jax.experimental.pallas import tpu as pltpu

IMG_SIZE = 4
NUM_F1 = 4
NUM_F2 = 1
FEAT = IMG_SIZE * IMG_SIZE          # 16 features per input row
PACK = 8                            # input rows packed per lane-dense slab row
LANES = PACK * FEAT                 # 128 input lanes per slab row
OUT_LANES = PACK * 2 * NUM_F2       # 16 output lanes per slab row


def net_kernel(x_ref, p_ref, b_ref, o_ref):
    # x_ref: (TR, 128) f32  -- 8 input rows (16 features each) per slab row
    # p_ref: (128, 16) f32  -- +/-w_eff block pattern (reduce + interleave)
    # b_ref: (1, 16)   f32  -- [0, 1, 0, 1, ...] bias implementing "1 - y"
    # o_ref: (TR, 16)  f32  -- lanes = [y0, 1-y0, y1, 1-y1, ..., y7, 1-y7]
    o_ref[...] = (
        jnp.dot(x_ref[...], p_ref[...],
                preferred_element_type=jnp.float32,
                precision=lax.Precision.HIGHEST)
        + b_ref[...]
    )


def _fold_weights(w1, w2):
    """BinarizeF (+1 if w >= 0 else -1) on both layers, then fold:
    fc2(fc1(x)) = x @ (sign(w2) @ sign(w1)).T ."""
    w1b = jnp.where(w1 >= 0.0, 1.0, -1.0).astype(jnp.float32)   # (4, 16)
    w2b = jnp.where(w2 >= 0.0, 1.0, -1.0).astype(jnp.float32)   # (1, 4)
    return w2b @ w1b                                            # (1, 16)


def _pattern_and_bias(w_eff):
    """Build (128, 16) pattern P and (1, 16) bias b such that, for a slab row
    holding 8 input rows back-to-back, slab_row @ P + b yields the lanes
    [y_0, 1-y_0, y_1, 1-y_1, ..., y_7, 1-y_7]."""
    lane = jnp.arange(LANES)
    col = jnp.arange(OUT_LANES)
    row_of_lane = lane // FEAT                    # packed input row (0..7)
    feat_of_lane = lane % FEAT                    # feature index (0..15)
    row_of_col = col // 2                         # which packed row the column is for
    sign_of_col = jnp.where(col % 2 == 0, 1.0, -1.0)   # +y / -y columns
    mask = (row_of_lane[:, None] == row_of_col[None, :]).astype(jnp.float32)
    pattern = mask * sign_of_col[None, :] * w_eff[0, feat_of_lane][:, None]
    bias = jnp.where(col % 2 == 0, 0.0, 1.0).reshape(1, OUT_LANES)
    return pattern.astype(jnp.float32), bias.astype(jnp.float32)


def net_forward(x_nchw, w1, w2, *, tile_rows=8192):
    """x_nchw: (B, 1, 4, 4); returns (B, 2) f32, matching Net.forward."""
    assert tile_rows % PACK == 0
    B = x_nchw.shape[0]
    x_flat = x_nchw.reshape(B, FEAT).astype(jnp.float32)

    # Pad only up to the next multiple of 8 rows (needed for the free
    # (B,16)->(B/8,128) lane-dense view); exact-multiple batches copy nothing.
    Bp = ((B + PACK - 1) // PACK) * PACK
    if Bp != B:
        x_flat = jnp.pad(x_flat, ((0, Bp - B), (0, 0)))
    rows = Bp // PACK
    x_slab = x_flat.reshape(rows, LANES)              # free row-major view

    w_eff = _fold_weights(w1.astype(jnp.float32), w2.astype(jnp.float32))
    pattern, bias = _pattern_and_bias(w_eff)

    # Single grid step unless the batch is big enough for tiling to pay off
    # (tile_rows slab rows = 8*tile_rows input rows = tile_rows*512 B of x).
    tr = rows if rows <= tile_rows else tile_rows
    grid = (pl.cdiv(rows, tr),)

    out_slab = pl.pallas_call(
        net_kernel,
        out_shape=jax.ShapeDtypeStruct((rows, OUT_LANES), jnp.float32),
        grid=grid,
        in_specs=[
            pl.BlockSpec((tr, LANES), lambda i: (i, 0)),
            pl.BlockSpec((LANES, OUT_LANES), lambda i: (0, 0)),   # resident
            pl.BlockSpec((1, OUT_LANES), lambda i: (0, 0)),       # resident
        ],
        out_specs=pl.BlockSpec((tr, OUT_LANES), lambda i: (i, 0)),
        compiler_params=pltpu.CompilerParams(
            dimension_semantics=("parallel",)),
    )(x_slab, pattern, bias)

    out = out_slab.reshape(Bp, 2 * NUM_F2)            # free view back to (B, 2)
    return out[:B] if Bp != B else out


def net_forward_ref(x_nchw, w1, w2):
    """Pure-JAX reference of the same forward pass (unfused)."""
    B = x_nchw.shape[0]
    x = x_nchw.reshape(B, FEAT).astype(jnp.float32)
    w1b = jnp.where(w1 >= 0.0, 1.0, -1.0)
    w2b = jnp.where(w2 >= 0.0, 1.0, -1.0)
    y = (x @ w1b.T) @ w2b.T
    return jnp.concatenate([y, 1.0 - y], axis=-1)


if __name__ == "__main__":
    key = jax.random.PRNGKey(0)
    kx, k1, k2 = jax.random.split(key, 3)

    # Small NCHW input like the PyTorch pipeline (4x4 downsampled, 1 channel).
    B = 32
    x = jax.random.uniform(kx, (B, 1, IMG_SIZE, IMG_SIZE), dtype=jnp.float32)
    # Latent (real-valued) weights; binarized + folded in the wrapper.
    w1 = jax.random.normal(k1, (NUM_F1, FEAT), dtype=jnp.float32)
    w2 = jax.random.normal(k2, (NUM_F2, NUM_F1), dtype=jnp.float32)

    out = jax.block_until_ready(net_forward(x, w1, w2))      # grid=(1,)
    ref = net_forward_ref(x, w1, w2)
    assert out.shape == (B, 2), out.shape
    assert jnp.allclose(out, ref, atol=1e-5, rtol=1e-5)

    # Ragged batch (not a multiple of 8) exercises the minimal-pad path.
    B2 = 13
    x2 = jax.random.uniform(kx, (B2, 1, IMG_SIZE, IMG_SIZE), dtype=jnp.float32)
    out2 = jax.block_until_ready(net_forward(x2, w1, w2))
    ref2 = net_forward_ref(x2, w1, w2)
    assert out2.shape == (B2, 2), out2.shape
    assert jnp.allclose(out2, ref2, atol=1e-5, rtol=1e-5)

    print("KERNEL_OK")
</pallas_src>

<mosaic_0001>
module attributes {stable_mosaic.version = 11 : i64} {
  func.func @net_kernel(%arg0: i32, %arg1: memref<4x128xf32, #tpu.memory_space<vmem>>, %arg2: memref<128x16xf32, #tpu.memory_space<vmem>>, %arg3: memref<1x16xf32, #tpu.memory_space<vmem>>, %arg4: memref<4x16xf32, #tpu.memory_space<vmem>>) attributes {dimension_semantics = [#tpu.dimension_semantics<parallel>], iteration_bounds = array<i64: 1>, scalar_prefetch = 0 : i64, scratch_operands = 0 : i64, tpu.core_type = #tpu.core_type<tc>, window_params = [{transform_indices = @transform_0, window_bounds = array<i64: 4, 128>}, {pipeline_mode = #tpu.pipeline_mode<synchronous>, transform_indices = @transform_1, window_bounds = array<i64: 128, 16>}, {pipeline_mode = #tpu.pipeline_mode<synchronous>, transform_indices = @transform_2, window_bounds = array<i64: 1, 16>}, {transform_indices = @transform_3, window_bounds = array<i64: 4, 16>}]} {
    %c0 = arith.constant 0 : index
    %c0_0 = arith.constant 0 : index
    %0 = vector.load %arg1[%c0, %c0_0] : memref<4x128xf32, #tpu.memory_space<vmem>>, vector<4x128xf32>
    %c0_1 = arith.constant 0 : index
    %c0_2 = arith.constant 0 : index
    %1 = vector.load %arg2[%c0_1, %c0_2] : memref<128x16xf32, #tpu.memory_space<vmem>>, vector<128x16xf32>
    %cst = arith.constant dense<0.000000e+00> : vector<4x16xf32>
    %2 = tpu.matmul %0, %1, %cst {dimension_numbers = #tpu.dot_dimension_numbers<[1], [0], [0], [1], [0, 0, 1, 1], [], []>, precision = #tpu.contract_precision<fp32>} : vector<4x128xf32>, vector<128x16xf32>, vector<4x16xf32> -> vector<4x16xf32>
    %c0_3 = arith.constant 0 : index
    %c0_4 = arith.constant 0 : index
    %3 = vector.load %arg3[%c0_3, %c0_4] : memref<1x16xf32, #tpu.memory_space<vmem>>, vector<1x16xf32>
    %4 = vector.broadcast %3 : vector<1x16xf32> to vector<4x16xf32>
    %5 = arith.addf %2, %4 : vector<4x16xf32>
    %c0_5 = arith.constant 0 : index
    %c0_6 = arith.constant 0 : index
    %6 = vector.load %arg4[%c0_5, %c0_6] : memref<4x16xf32, #tpu.memory_space<vmem>>, vector<4x16xf32>
    tpu.vector_store %arg4[%c0_5, %c0_6], %5 {strides = array<i32>} : memref<4x16xf32, #tpu.memory_space<vmem>>, vector<4x16xf32>,
    return
  }
  func.func @transform_0(%arg0: i32) -> (i32, i32) {
    %c0_i32 = arith.constant 0 : i32
    %c0_i32_0 = arith.constant 0 : i32
    return %arg0, %c0_i32 : i32, i32
  }
  func.func @transform_1(%arg0: i32) -> (i32, i32) {
    %c0_i32 = arith.constant 0 : i32
    %c0_i32_0 = arith.constant 0 : i32
    %c0_i32_1 = arith.constant 0 : i32
    return %c0_i32, %c0_i32_0 : i32, i32
  }
  func.func @transform_2(%arg0: i32) -> (i32, i32) {
    %c0_i32 = arith.constant 0 : i32
    %c0_i32_0 = arith.constant 0 : i32
    %c0_i32_1 = arith.constant 0 : i32
    return %c0_i32, %c0_i32_0 : i32, i32
  }
  func.func @transform_3(%arg0: i32) -> (i32, i32) {
    %c0_i32 = arith.constant 0 : i32
    %c0_i32_0 = arith.constant 0 : i32
    return %arg0, %c0_i32 : i32, i32
  }
}

</mosaic_0001>

<llo_original>
// kernel: tpu_custom_call.1
$region0: #{tpu_custom_call.1}
  #allocation0 [shape = 'u32[]', space=smem, size = 0x4, offset = 0x4, fixed_abs, tag = 'smem constant byte address 0x4 - core index']
  #allocation1 [shape = 'u32[144,128]{1,0:T(1,128)}', space=vmem, size = 0x12000, scoped, tag = 'internal scratch']
  %s0 = inlined_call_operand.vmem [shape: f32[4,128], index: 0, kind: input, shape index: {}]
  %s1 = inlined_call_operand.vmem [shape: f32[128,16], index: 1, kind: input, shape index: {}]
  %s2 = inlined_call_operand.vmem [shape: f32[1,16], index: 2, kind: input, shape index: {}]
  %s3 = inlined_call_operand.hbm [shape: f32[4,16], index: 3, kind: output, shape index: {}]
  %s4 = sld [smem:[#allocation0]]
  $region22: #{tpu_custom_call.1} parent=0
    _
  %s6 = ssub.s32 1, %s4
  %s7 = scalar_select 0, %s6, %s4
  $region1: #{tpu_custom_call.1} parent=0
    #allocation2 [shape = 'u8[2048]{0}', space=vmem, size = 0x800, scoped, tag = 'output window, operand 0, single buffered']
    #allocation3 [shape = 's32[1]{0}', space=sflag, size = 0x4, scoped, tag = 'scoped memory for tpu_custom_call.1']
    %8 = vsyncpa [#allocation3], 0
    // Predicated region
    $region2: #{tpu_custom_call.1} parent=1 // pred_check
      _
    $region3: #{tpu_custom_call.1} parent=1 // pred_check_branch
      %10 = sbr.rel (0) target = $region5
    $region4: #{tpu_custom_call.1} parent=1 // pred_region
      _
    $region5: #{tpu_custom_call.1} parent=1 // pred_fallthru
      _
    // Predicated region
    $region6: #{tpu_custom_call.1} parent=1 // pred_check
      _
    $region7: #{tpu_custom_call.1} parent=1 // pred_check_branch
      %12 = sbr.rel (0) target = $region9
    $region8: #{tpu_custom_call.1} parent=1 // pred_region
      _
    $region9: #{tpu_custom_call.1} parent=1 // pred_fallthru
      _
    // Predicated region
    $region10: #{tpu_custom_call.1} parent=1 // pred_check
      _
    $region11: #{tpu_custom_call.1} parent=1 // pred_check_branch
      %14 = sbr.rel (0) target = $region13
    $region12: #{tpu_custom_call.1} parent=1 // pred_region
      _
    $region13: #{tpu_custom_call.1} parent=1 // pred_fallthru
      _
    %v15 = vld [vmem:[%s0] sm:$0xf]
    %v16 = vld [vmem:[%s1] sm:$0xff]
    %v17 = vld [vmem:[%s1 + $0x8] sm:$0xff]
    %v18 = vld [vmem:[%s1 + $0x10] sm:$0xff]
    %v19 = vld [vmem:[%s1 + $0x18] sm:$0xff]
    %v20 = vld [vmem:[%s1 + $0x20] sm:$0xff]
    %v21 = vld [vmem:[%s1 + $0x28] sm:$0xff]
    %v22 = vld [vmem:[%s1 + $0x30] sm:$0xff]
    %v23 = vld [vmem:[%s1 + $0x38] sm:$0xff]
    %v24 = vld [vmem:[%s1 + $0x40] sm:$0xff]
    %v25 = vld [vmem:[%s1 + $0x48] sm:$0xff]
    %v26 = vld [vmem:[%s1 + $0x50] sm:$0xff]
    %v27 = vld [vmem:[%s1 + $0x58] sm:$0xff]
    %v28 = vld [vmem:[%s1 + $0x60] sm:$0xff]
    %v29 = vld [vmem:[%s1 + $0x68] sm:$0xff]
    %v30 = vld [vmem:[%s1 + $0x70] sm:$0xff]
    %v31 = vld [vmem:[%s1 + $0x78] sm:$0xff]
    %v32 = vld [vmem:[%s2] sm:$0x1]
    %v34 = vlaneseq
    %v35 = vshrl.u32 %v34, 7
    %v36 = vsub.s32 0, %v35
    %v37 = vrot.slane %v32, %v36
    %39 = vmatprep.subr.mxu0 0.0
    %v40 = vand.u32 %v16, 4294901760
    %41 = vmatpush1.msra.mxu0 %v40
    %42 = vmatprep.subr.mxu0 0.0
    %v43 = vand.u32 %v17, 4294901760
    %44 = vmatpush1.msra.mxu0 %v43
    %45 = vmatprep.subr.mxu0 0.0
    %v46 = vand.u32 %v18, 4294901760
    %47 = vmatpush1.msra.mxu0 %v46
    %48 = vmatprep.subr.mxu0 0.0
    %v49 = vand.u32 %v19, 4294901760
    %50 = vmatpush1.msra.mxu0 %v49
    %51 = vmatprep.subr.mxu0 0.0
    %v52 = vand.u32 %v20, 4294901760
    %53 = vmatpush1.msra.mxu0 %v52
    %54 = vmatprep.subr.mxu0 0.0
    %v55 = vand.u32 %v21, 4294901760
    %56 = vmatpush1.msra.mxu0 %v55
    %57 = vmatprep.subr.mxu0 0.0
    %v58 = vand.u32 %v22, 4294901760
    %59 = vmatpush1.msra.mxu0 %v58
    %60 = vmatprep.subr.mxu0 0.0
    %v61 = vand.u32 %v23, 4294901760
    %62 = vmatpush1.msra.mxu0 %v61
    %63 = vmatprep.subr.mxu0 0.0
    %v64 = vand.u32 %v24, 4294901760
    %65 = vmatpush1.msra.mxu0 %v64
    %66 = vmatprep.subr.mxu0 0.0
    %v67 = vand.u32 %v25, 4294901760
    %68 = vmatpush1.msra.mxu0 %v67
    %69 = vmatprep.subr.mxu0 0.0
    %v70 = vand.u32 %v26, 4294901760
    %71 = vmatpush1.msra.mxu0 %v70
    %72 = vmatprep.subr.mxu0 0.0
    %v73 = vand.u32 %v27, 4294901760
    %74 = vmatpush1.msra.mxu0 %v73
    %75 = vmatprep.subr.mxu0 0.0
    %v76 = vand.u32 %v28, 4294901760
    %77 = vmatpush1.msra.mxu0 %v76
    %78 = vmatprep.subr.mxu0 0.0
    %v79 = vand.u32 %v29, 4294901760
    %80 = vmatpush1.msra.mxu0 %v79
    %81 = vmatprep.subr.mxu0 0.0
    %v82 = vand.u32 %v30, 4294901760
    %83 = vmatpush1.msra.mxu0 %v82
    %84 = vmatprep.subr.mxu0 0.0
    %v85 = vand.u32 %v31, 4294901760
    %86 = vmatpush1.msra.mxu0 %v85
    %87 = vmatprep.subr.mxu0 0.0
    %88 = vmatpush1.msra.mxu0 0.0
    %89 = vmatprep.subr.mxu0 0.0
    %90 = vmatpush1.msra.mxu0 0.0
    %91 = vmatprep.subr.mxu0 0.0
    %92 = vmatpush1.msra.mxu0 0.0
    %93 = vmatprep.subr.mxu0 0.0
    %94 = vmatpush1.msra.mxu0 0.0
    %95 = vmatprep.subr.mxu0 0.0
    %96 = vmatpush1.msra.mxu0 0.0
    %97 = vmatprep.subr.mxu0 0.0
    %98 = vmatpush1.msra.mxu0 0.0
    %99 = vmatprep.subr.mxu0 0.0
    %100 = vmatpush1.msra.mxu0 0.0
    %101 = vmatprep.subr.mxu0 0.0
    %102 = vmatpush1.msra.mxu0 0.0
    %103 = vmatprep.subr.mxu0 0.0
    %104 = vmatpush1.msra.mxu0 0.0
    %105 = vmatprep.subr.mxu0 0.0
    %106 = vmatpush1.msra.mxu0 0.0
    %107 = vmatprep.subr.mxu0 0.0
    %108 = vmatpush1.msra.mxu0 0.0
    %109 = vmatprep.subr.mxu0 0.0
    %110 = vmatpush1.msra.mxu0 0.0
    %111 = vmatprep.subr.mxu0 0.0
    %112 = vmatpush1.msra.mxu0 0.0
    %113 = vmatprep.subr.mxu0 0.0
    %114 = vmatpush1.msra.mxu0 0.0
    %115 = vmatprep.subr.mxu0 0.0
    %116 = vmatpush1.msra.mxu0 0.0
    %117 = vmatprep.subr.mxu0 0.0
    %118 = vmatpush1.msra.mxu0 0.0
    %119 = vmatprep.mubr.f32.mxu0 0.0
    %v120 = vand.u32 %v15, 4294901760
    %v121 = vsub.f32 %v15, %v120
    %v122 = vand.u32 %v121, 4294901760
    %v123 = vsub.f32 %v121, %v122
    %v124 = vand.u32 %v123, 4294901760
    %125 = vmatmul.mubr.f32.gmra.mrb[0].mxu0 %v124
    %v126 = vpop.f32.mrb[0].mxu0
    %v127 = vadd.f32 %v37, %v126
    %v128 = vpop.f32.mrb[0].mxu0
    %129 = vdwg.mxu0
    %130 = vmatprep.subr.mxu0 0.0
    %v131 = vand.u32 %v16, 4294901760
    %v132 = vsub.f32 %v16, %v131
    %v133 = vand.u32 %v132, 4294901760
    %v134 = vsub.f32 %v132, %v133
    %v135 = vand.u32 %v134, 4294901760
    %136 = vmatpush1.msra.mxu0 %v135
    %137 = vmatprep.subr.mxu0 0.0
    %v138 = vand.u32 %v17, 4294901760
    %v139 = vsub.f32 %v17, %v138
    %v140 = vand.u32 %v139, 4294901760
    %v141 = vsub.f32 %v139, %v140
    %v142 = vand.u32 %v141, 4294901760
    %143 = vmatpush1.msra.mxu0 %v142
    %144 = vmatprep.subr.mxu0 0.0
    %v145 = vand.u32 %v18, 4294901760
    %v146 = vsub.f32 %v18, %v145
    %v147 = vand.u32 %v146, 4294901760
    %v148 = vsub.f32 %v146, %v147
    %v149 = vand.u32 %v148, 4294901760
    %150 = vmatpush1.msra.mxu0 %v149
    %151 = vmatprep.subr.mxu0 0.0
    %v152 = vand.u32 %v19, 4294901760
    %v153 = vsub.f32 %v19, %v152
    %v154 = vand.u32 %v153, 4294901760
    %v155 = vsub.f32 %v153, %v154
    %v156 = vand.u32 %v155, 4294901760
    %157 = vmatpush1.msra.mxu0 %v156
    %158 = vmatprep.subr.mxu0 0.0
    %v159 = vand.u32 %v20, 4294901760
    %v160 = vsub.f32 %v20, %v159
    %v161 = vand.u32 %v160, 4294901760
    %v162 = vsub.f32 %v160, %v161
    %v163 = vand.u32 %v162, 4294901760
    %164 = vmatpush1.msra.mxu0 %v163
    %165 = vmatprep.subr.mxu0 0.0
    %v166 = vand.u32 %v21, 4294901760
    %v167 = vsub.f32 %v21, %v166
    %v168 = vand.u32 %v167, 4294901760
    %v169 = vsub.f32 %v167, %v168
    %v170 = vand.u32 %v169, 4294901760
    %171 = vmatpush1.msra.mxu0 %v170
    %172 = vmatprep.subr.mxu0 0.0
    %v173 = vand.u32 %v22, 4294901760
    %v174 = vsub.f32 %v22, %v173
    %v175 = vand.u32 %v174, 4294901760
    %v176 = vsub.f32 %v174, %v175
    %v177 = vand.u32 %v176, 4294901760
    %178 = vmatpush1.msra.mxu0 %v177
    %179 = vmatprep.subr.mxu0 0.0
    %v180 = vand.u32 %v23, 4294901760
    %v181 = vsub.f32 %v23, %v180
    %v182 = vand.u32 %v181, 4294901760
    %v183 = vsub.f32 %v181, %v182
    %v184 = vand.u32 %v183, 4294901760
    %185 = vmatpush1.msra.mxu0 %v184
    %186 = vmatprep.subr.mxu0 0.0
    %v187 = vand.u32 %v24, 4294901760
    %v188 = vsub.f32 %v24, %v187
    %v189 = vand.u32 %v188, 4294901760
    %v190 = vsub.f32 %v188, %v189
    %v191 = vand.u32 %v190, 4294901760
    %192 = vmatpush1.msra.mxu0 %v191
    %193 = vmatprep.subr.mxu0 0.0
    %v194 = vand.u32 %v25, 4294901760
    %v195 = vsub.f32 %v25, %v194
    %v196 = vand.u32 %v195, 4294901760
    %v197 = vsub.f32 %v195, %v196
    %v198 = vand.u32 %v197, 4294901760
    %199 = vmatpush1.msra.mxu0 %v198
    %200 = vmatprep.subr.mxu0 0.0
    %v201 = vand.u32 %v26, 4294901760
    %v202 = vsub.f32 %v26, %v201
    %v203 = vand.u32 %v202, 4294901760
    %v204 = vsub.f32 %v202, %v203
    %v205 = vand.u32 %v204, 4294901760
    %206 = vmatpush1.msra.mxu0 %v205
    %207 = vmatprep.subr.mxu0 0.0
    %v208 = vand.u32 %v27, 4294901760
    %v209 = vsub.f32 %v27, %v208
    %v210 = vand.u32 %v209, 4294901760
    %v211 = vsub.f32 %v209, %v210
    %v212 = vand.u32 %v211, 4294901760
    %213 = vmatpush1.msra.mxu0 %v212
    %214 = vmatprep.subr.mxu0 0.0
    %v215 = vand.u32 %v28, 4294901760
    %v216 = vsub.f32 %v28, %v215
    %v217 = vand.u32 %v216, 4294901760
    %v218 = vsub.f32 %v216, %v217
    %v219 = vand.u32 %v218, 4294901760
    %220 = vmatpush1.msra.mxu0 %v219
    %221 = vmatprep.subr.mxu0 0.0
    %v222 = vand.u32 %v29, 4294901760
    %v223 = vsub.f32 %v29, %v222
    %v224 = vand.u32 %v223, 4294901760
    %v225 = vsub.f32 %v223, %v224
    %v226 = vand.u32 %v225, 4294901760
    %227 = vmatpush1.msra.mxu0 %v226
    %228 = vmatprep.subr.mxu0 0.0
    %v229 = vand.u32 %v30, 4294901760
    %v230 = vsub.f32 %v30, %v229
    %v231 = vand.u32 %v230, 4294901760
    %v232 = vsub.f32 %v230, %v231
    %v233 = vand.u32 %v232, 4294901760
    %234 = vmatpush1.msra.mxu0 %v233
    %235 = vmatprep.subr.mxu0 0.0
    %v236 = vand.u32 %v31, 4294901760
    %v237 = vsub.f32 %v31, %v236
    %v238 = vand.u32 %v237, 4294901760
    %v239 = vsub.f32 %v237, %v238
    %v240 = vand.u32 %v239, 4294901760
    %241 = vmatpush1.msra.mxu0 %v240
    %242 = vmatprep.subr.mxu0 0.0
    %243 = vmatpush1.msra.mxu0 0.0
    %244 = vmatprep.subr.mxu0 0.0
    %245 = vmatpush1.msra.mxu0 0.0
    %246 = vmatprep.subr.mxu0 0.0
    %247 = vmatpush1.msra.mxu0 0.0
    %248 = vmatprep.subr.mxu0 0.0
    %249 = vmatpush1.msra.mxu0 0.0
    %250 = vmatprep.subr.mxu0 0.0
    %251 = vmatpush1.msra.mxu0 0.0
    %252 = vmatprep.subr.mxu0 0.0
    %253 = vmatpush1.msra.mxu0 0.0
    %254 = vmatprep.subr.mxu0 0.0
    %255 = vmatpush1.msra.mxu0 0.0
    %256 = vmatprep.subr.mxu0 0.0
    %257 = vmatpush1.msra.mxu0 0.0
    %258 = vmatprep.subr.mxu0 0.0
    %259 = vmatpush1.msra.mxu0 0.0
    %260 = vmatprep.subr.mxu0 0.0
    %261 = vmatpush1.msra.mxu0 0.0
    %262 = vmatprep.subr.mxu0 0.0
    %263 = vmatpush1.msra.mxu0 0.0
    %264 = vmatprep.subr.mxu0 0.0
    %265 = vmatpush1.msra.mxu0 0.0
    %266 = vmatprep.subr.mxu0 0.0
    %267 = vmatpush1.msra.mxu0 0.0
    %268 = vmatprep.subr.mxu0 0.0
    %269 = vmatpush1.msra.mxu0 0.0
    %270 = vmatprep.subr.mxu0 0.0
    %271 = vmatpush1.msra.mxu0 0.0
    %272 = vmatprep.subr.mxu0 0.0
    %273 = vmatpush1.msra.mxu0 0.0
    %274 = vmatprep.mubr.f32.mxu0 0.0
    %v275 = vand.u32 %v15, 4294901760
    %276 = vmatmul.mubr.f32.gmra.mrb[0].mxu0 %v275
    %v277 = vpop.f32.mrb[0].mxu0
    %v278 = vadd.f32 %v127, %v277
    %v279 = vpop.f32.mrb[0].mxu0
    %280 = vdwg.mxu0
    %281 = vmatprep.subr.mxu0 0.0
    %v282 = vand.u32 %v16, 4294901760
    %v283 = vsub.f32 %v16, %v282
    %284 = vmatpush1.msra.mxu0 %v283
    %285 = vmatprep.subr.mxu0 0.0
    %v286 = vand.u32 %v17, 4294901760
    %v287 = vsub.f32 %v17, %v286
    %288 = vmatpush1.msra.mxu0 %v287
    %289 = vmatprep.subr.mxu0 0.0
    %v290 = vand.u32 %v18, 4294901760
    %v291 = vsub.f32 %v18, %v290
    %292 = vmatpush1.msra.mxu0 %v291
    %293 = vmatprep.subr.mxu0 0.0
    %v294 = vand.u32 %v19, 4294901760
    %v295 = vsub.f32 %v19, %v294
    %296 = vmatpush1.msra.mxu0 %v295
    %297 = vmatprep.subr.mxu0 0.0
    %v298 = vand.u32 %v20, 4294901760
    %v299 = vsub.f32 %v20, %v298
    %300 = vmatpush1.msra.mxu0 %v299
    %301 = vmatprep.subr.mxu0 0.0
    %v302 = vand.u32 %v21, 4294901760
    %v303 = vsub.f32 %v21, %v302
    %304 = vmatpush1.msra.mxu0 %v303
    %305 = vmatprep.subr.mxu0 0.0
    %v306 = vand.u32 %v22, 4294901760
    %v307 = vsub.f32 %v22, %v306
    %308 = vmatpush1.msra.mxu0 %v307
    %309 = vmatprep.subr.mxu0 0.0
    %v310 = vand.u32 %v23, 4294901760
    %v311 = vsub.f32 %v23, %v310
    %312 = vmatpush1.msra.mxu0 %v311
    %313 = vmatprep.subr.mxu0 0.0
    %v314 = vand.u32 %v24, 4294901760
    %v315 = vsub.f32 %v24, %v314
    %316 = vmatpush1.msra.mxu0 %v315
    %317 = vmatprep.subr.mxu0 0.0
    %v318 = vand.u32 %v25, 4294901760
    %v319 = vsub.f32 %v25, %v318
    %320 = vmatpush1.msra.mxu0 %v319
    %321 = vmatprep.subr.mxu0 0.0
    %v322 = vand.u32 %v26, 4294901760
    %v323 = vsub.f32 %v26, %v322
    %324 = vmatpush1.msra.mxu0 %v323
    %325 = vmatprep.subr.mxu0 0.0
    %v326 = vand.u32 %v27, 4294901760
    %v327 = vsub.f32 %v27, %v326
    %328 = vmatpush1.msra.mxu0 %v327
    %329 = vmatprep.subr.mxu0 0.0
    %v330 = vand.u32 %v28, 4294901760
    %v331 = vsub.f32 %v28, %v330
    %332 = vmatpush1.msra.mxu0 %v331
    %333 = vmatprep.subr.mxu0 0.0
    %v334 = vand.u32 %v29, 4294901760
    %v335 = vsub.f32 %v29, %v334
    %336 = vmatpush1.msra.mxu0 %v335
    %337 = vmatprep.subr.mxu0 0.0
    %v338 = vand.u32 %v30, 4294901760
    %v339 = vsub.f32 %v30, %v338
    %340 = vmatpush1.msra.mxu0 %v339
    %341 = vmatprep.subr.mxu0 0.0
    %v342 = vand.u32 %v31, 4294901760
    %v343 = vsub.f32 %v31, %v342
    %344 = vmatpush1.msra.mxu0 %v343
    %345 = vmatprep.subr.mxu0 0.0
    %346 = vmatpush1.msra.mxu0 0.0
    %347 = vmatprep.subr.mxu0 0.0
    %348 = vmatpush1.msra.mxu0 0.0
    %349 = vmatprep.subr.mxu0 0.0
    %350 = vmatpush1.msra.mxu0 0.0
    %351 = vmatprep.subr.mxu0 0.0
    %352 = vmatpush1.msra.mxu0 0.0
    %353 = vmatprep.subr.mxu0 0.0
    %354 = vmatpush1.msra.mxu0 0.0
    %355 = vmatprep.subr.mxu0 0.0
    %356 = vmatpush1.msra.mxu0 0.0
    %357 = vmatprep.subr.mxu0 0.0
    %358 = vmatpush1.msra.mxu0 0.0
    %359 = vmatprep.subr.mxu0 0.0
    %360 = vmatpush1.msra.mxu0 0.0
    %361 = vmatprep.subr.mxu0 0.0
    %362 = vmatpush1.msra.mxu0 0.0
    %363 = vmatprep.subr.mxu0 0.0
    %364 = vmatpush1.msra.mxu0 0.0
    %365 = vmatprep.subr.mxu0 0.0
    %366 = vmatpush1.msra.mxu0 0.0
    %367 = vmatprep.subr.mxu0 0.0
    %368 = vmatpush1.msra.mxu0 0.0
    %369 = vmatprep.subr.mxu0 0.0
    %370 = vmatpush1.msra.mxu0 0.0
    %371 = vmatprep.subr.mxu0 0.0
    %372 = vmatpush1.msra.mxu0 0.0
    %373 = vmatprep.subr.mxu0 0.0
    %374 = vmatpush1.msra.mxu0 0.0
    %375 = vmatprep.subr.mxu0 0.0
    %376 = vmatpush1.msra.mxu0 0.0
    %377 = vmatprep.mubr.f32.mxu0 0.0
    %v378 = vand.u32 %v15, 4294901760
    %v379 = vsub.f32 %v15, %v378
    %380 = vmatmul.mubr.f32.gmra.mrb[0].mxu0 %v379
    %v381 = vpop.f32.mrb[0].mxu0
    %v382 = vadd.f32 %v278, %v381
    %v383 = vpop.f32.mrb[0].mxu0
    %384 = vdwg.mxu0
    %385 = vmatprep.subr.mxu0 0.0
    %v386 = vand.u32 %v16, 4294901760
    %387 = vmatpush1.msra.mxu0 %v386
    %388 = vmatprep.subr.mxu0 0.0
    %v389 = vand.u32 %v17, 4294901760
    %390 = vmatpush1.msra.mxu0 %v389
    %391 = vmatprep.subr.mxu0 0.0
    %v392 = vand.u32 %v18, 4294901760
    %393 = vmatpush1.msra.mxu0 %v392
    %394 = vmatprep.subr.mxu0 0.0
    %v395 = vand.u32 %v19, 4294901760
    %396 = vmatpush1.msra.mxu0 %v395
    %397 = vmatprep.subr.mxu0 0.0
    %v398 = vand.u32 %v20, 4294901760
    %399 = vmatpush1.msra.mxu0 %v398
    %400 = vmatprep.subr.mxu0 0.0
    %v401 = vand.u32 %v21, 4294901760
    %402 = vmatpush1.msra.mxu0 %v401
    %403 = vmatprep.subr.mxu0 0.0
    %v404 = vand.u32 %v22, 4294901760
    %405 = vmatpush1.msra.mxu0 %v404
    %406 = vmatprep.subr.mxu0 0.0
    %v407 = vand.u32 %v23, 4294901760
    %408 = vmatpush1.msra.mxu0 %v407
    %409 = vmatprep.subr.mxu0 0.0
    %v410 = vand.u32 %v24, 4294901760
    %411 = vmatpush1.msra.mxu0 %v410
    %412 = vmatprep.subr.mxu0 0.0
    %v413 = vand.u32 %v25, 4294901760
    %414 = vmatpush1.msra.mxu0 %v413
    %415 = vmatprep.subr.mxu0 0.0
    %v416 = vand.u32 %v26, 4294901760
    %417 = vmatpush1.msra.mxu0 %v416
    %418 = vmatprep.subr.mxu0 0.0
    %v419 = vand.u32 %v27, 4294901760
    %420 = vmatpush1.msra.mxu0 %v419
    %421 = vmatprep.subr.mxu0 0.0
    %v422 = vand.u32 %v28, 4294901760
    %423 = vmatpush1.msra.mxu0 %v422
    %424 = vmatprep.subr.mxu0 0.0
    %v425 = vand.u32 %v29, 4294901760
    %426 = vmatpush1.msra.mxu0 %v425
    %427 = vmatprep.subr.mxu0 0.0
    %v428 = vand.u32 %v30, 4294901760
    %429 = vmatpush1.msra.mxu0 %v428
    %430 = vmatprep.subr.mxu0 0.0
    %v431 = vand.u32 %v31, 4294901760
    %432 = vmatpush1.msra.mxu0 %v431
    %433 = vmatprep.subr.mxu0 0.0
    %434 = vmatpush1.msra.mxu0 0.0
    %435 = vmatprep.subr.mxu0 0.0
    %436 = vmatpush1.msra.mxu0 0.0
    %437 = vmatprep.subr.mxu0 0.0
    %438 = vmatpush1.msra.mxu0 0.0
    %439 = vmatprep.subr.mxu0 0.0
    %440 = vmatpush1.msra.mxu0 0.0
    %441 = vmatprep.subr.mxu0 0.0
    %442 = vmatpush1.msra.mxu0 0.0
    %443 = vmatprep.subr.mxu0 0.0
    %444 = vmatpush1.msra.mxu0 0.0
    %445 = vmatprep.subr.mxu0 0.0
    %446 = vmatpush1.msra.mxu0 0.0
    %447 = vmatprep.subr.mxu0 0.0
    %448 = vmatpush1.msra.mxu0 0.0
    %449 = vmatprep.subr.mxu0 0.0
    %450 = vmatpush1.msra.mxu0 0.0
    %451 = vmatprep.subr.mxu0 0.0
    %452 = vmatpush1.msra.mxu0 0.0
    %453 = vmatprep.subr.mxu0 0.0
    %454 = vmatpush1.msra.mxu0 0.0
    %455 = vmatprep.subr.mxu0 0.0
    %456 = vmatpush1.msra.mxu0 0.0
    %457 = vmatprep.subr.mxu0 0.0
    %458 = vmatpush1.msra.mxu0 0.0
    %459 = vmatprep.subr.mxu0 0.0
    %460 = vmatpush1.msra.mxu0 0.0
    %461 = vmatprep.subr.mxu0 0.0
    %462 = vmatpush1.msra.mxu0 0.0
    %463 = vmatprep.subr.mxu0 0.0
    %464 = vmatpush1.msra.mxu0 0.0
    %465 = vmatprep.mubr.f32.mxu0 0.0
    %v466 = vand.u32 %v15, 4294901760
    %v467 = vsub.f32 %v15, %v466
    %v468 = vand.u32 %v467, 4294901760
    %469 = vmatmul.mubr.f32.gmra.mrb[0].mxu0 %v468
    %v470 = vpop.f32.mrb[0].mxu0
    %v471 = vadd.f32 %v382, %v470
    %v472 = vpop.f32.mrb[0].mxu0
    %473 = vdwg.mxu0
    %474 = vmatprep.subr.mxu0 0.0
    %v475 = vand.u32 %v16, 4294901760
    %v476 = vsub.f32 %v16, %v475
    %v477 = vand.u32 %v476, 4294901760
    %478 = vmatpush1.msra.mxu0 %v477
    %479 = vmatprep.subr.mxu0 0.0
    %v480 = vand.u32 %v17, 4294901760
    %v481 = vsub.f32 %v17, %v480
    %v482 = vand.u32 %v481, 4294901760
    %483 = vmatpush1.msra.mxu0 %v482
    %484 = vmatprep.subr.mxu0 0.0
    %v485 = vand.u32 %v18, 4294901760
    %v486 = vsub.f32 %v18, %v485
    %v487 = vand.u32 %v486, 4294901760
    %488 = vmatpush1.msra.mxu0 %v487
    %489 = vmatprep.subr.mxu0 0.0
    %v490 = vand.u32 %v19, 4294901760
    %v491 = vsub.f32 %v19, %v490
    %v492 = vand.u32 %v491, 4294901760
    %493 = vmatpush1.msra.mxu0 %v492
    %494 = vmatprep.subr.mxu0 0.0
    %v495 = vand.u32 %v20, 4294901760
    %v496 = vsub.f32 %v20, %v495
    %v497 = vand.u32 %v496, 4294901760
    %498 = vmatpush1.msra.mxu0 %v497
    %499 = vmatprep.subr.mxu0 0.0
    %v500 = vand.u32 %v21, 4294901760
    %v501 = vsub.f32 %v21, %v500
    %v502 = vand.u32 %v501, 4294901760
    %503 = vmatpush1.msra.mxu0 %v502
    %504 = vmatprep.subr.mxu0 0.0
    %v505 = vand.u32 %v22, 4294901760
    %v506 = vsub.f32 %v22, %v505
    %v507 = vand.u32 %v506, 4294901760
    %508 = vmatpush1.msra.mxu0 %v507
    %509 = vmatprep.subr.mxu0 0.0
    %v510 = vand.u32 %v23, 4294901760
    %v511 = vsub.f32 %v23, %v510
    %v512 = vand.u32 %v511, 4294901760
    %513 = vmatpush1.msra.mxu0 %v512
    %514 = vmatprep.subr.mxu0 0.0
    %v515 = vand.u32 %v24, 4294901760
    %v516 = vsub.f32 %v24, %v515
    %v517 = vand.u32 %v516, 4294901760
    %518 = vmatpush1.msra.mxu0 %v517
    %519 = vmatprep.subr.mxu0 0.0
    %v520 = vand.u32 %v25, 4294901760
    %v521 = vsub.f32 %v25, %v520
    %v522 = vand.u32 %v521, 4294901760
    %523 = vmatpush1.msra.mxu0 %v522
    %524 = vmatprep.subr.mxu0 0.0
    %v525 = vand.u32 %v26, 4294901760
    %v526 = vsub.f32 %v26, %v525
    %v527 = vand.u32 %v526, 4294901760
    %528 = vmatpush1.msra.mxu0 %v527
    %529 = vmatprep.subr.mxu0 0.0
    %v530 = vand.u32 %v27, 4294901760
    %v531 = vsub.f32 %v27, %v530
    %v532 = vand.u32 %v531, 4294901760
    %533 = vmatpush1.msra.mxu0 %v532
    %534 = vmatprep.subr.mxu0 0.0
    %v535 = vand.u32 %v28, 4294901760
    %v536 = vsub.f32 %v28, %v535
    %v537 = vand.u32 %v536, 4294901760
    %538 = vmatpush1.msra.mxu0 %v537
    %539 = vmatprep.subr.mxu0 0.0
    %v540 = vand.u32 %v29, 4294901760
    %v541 = vsub.f32 %v29, %v540
    %v542 = vand.u32 %v541, 4294901760
    %543 = vmatpush1.msra.mxu0 %v542
    %544 = vmatprep.subr.mxu0 0.0
    %v545 = vand.u32 %v30, 4294901760
    %v546 = vsub.f32 %v30, %v545
    %v547 = vand.u32 %v546, 4294901760
    %548 = vmatpush1.msra.mxu0 %v547
    %549 = vmatprep.subr.mxu0 0.0
    %v550 = vand.u32 %v31, 4294901760
    %v551 = vsub.f32 %v31, %v550
    %v552 = vand.u32 %v551, 4294901760
    %553 = vmatpush1.msra.mxu0 %v552
    %554 = vmatprep.subr.mxu0 0.0
    %555 = vmatpush1.msra.mxu0 0.0
    %556 = vmatprep.subr.mxu0 0.0
    %557 = vmatpush1.msra.mxu0 0.0
    %558 = vmatprep.subr.mxu0 0.0
    %559 = vmatpush1.msra.mxu0 0.0
    %560 = vmatprep.subr.mxu0 0.0
    %561 = vmatpush1.msra.mxu0 0.0
    %562 = vmatprep.subr.mxu0 0.0
    %563 = vmatpush1.msra.mxu0 0.0
    %564 = vmatprep.subr.mxu0 0.0
    %565 = vmatpush1.msra.mxu0 0.0
    %566 = vmatprep.subr.mxu0 0.0
    %567 = vmatpush1.msra.mxu0 0.0
    %568 = vmatprep.subr.mxu0 0.0
    %569 = vmatpush1.msra.mxu0 0.0
    %570 = vmatprep.subr.mxu0 0.0
    %571 = vmatpush1.msra.mxu0 0.0
    %572 = vmatprep.subr.mxu0 0.0
    %573 = vmatpush1.msra.mxu0 0.0
    %574 = vmatprep.subr.mxu0 0.0
    %575 = vmatpush1.msra.mxu0 0.0
    %576 = vmatprep.subr.mxu0 0.0
    %577 = vmatpush1.msra.mxu0 0.0
    %578 = vmatprep.subr.mxu0 0.0
    %579 = vmatpush1.msra.mxu0 0.0
    %580 = vmatprep.subr.mxu0 0.0
    %581 = vmatpush1.msra.mxu0 0.0
    %582 = vmatprep.subr.mxu0 0.0
    %583 = vmatpush1.msra.mxu0 0.0
    %584 = vmatprep.subr.mxu0 0.0
    %585 = vmatpush1.msra.mxu0 0.0
    %586 = vmatprep.mubr.f32.mxu0 0.0
    %v587 = vand.u32 %v15, 4294901760
    %588 = vmatmul.mubr.f32.gmra.mrb[0].mxu0 %v587
    %v589 = vpop.f32.mrb[0].mxu0
    %v590 = vadd.f32 %v471, %v589
    %v591 = vpop.f32.mrb[0].mxu0
    %592 = vdwg.mxu0
    %593 = vmatprep.subr.mxu0 0.0
    %v594 = vand.u32 %v16, 4294901760
    %595 = vmatpush1.msra.mxu0 %v594
    %596 = vmatprep.subr.mxu0 0.0
    %v597 = vand.u32 %v17, 4294901760
    %598 = vmatpush1.msra.mxu0 %v597
    %599 = vmatprep.subr.mxu0 0.0
    %v600 = vand.u32 %v18, 4294901760
    %601 = vmatpush1.msra.mxu0 %v600
    %602 = vmatprep.subr.mxu0 0.0
    %v603 = vand.u32 %v19, 4294901760
    %604 = vmatpush1.msra.mxu0 %v603
    %605 = vmatprep.subr.mxu0 0.0
    %v606 = vand.u32 %v20, 4294901760
    %607 = vmatpush1.msra.mxu0 %v606
    %608 = vmatprep.subr.mxu0 0.0
    %v609 = vand.u32 %v21, 4294901760
    %610 = vmatpush1.msra.mxu0 %v609
    %611 = vmatprep.subr.mxu0 0.0
    %v612 = vand.u32 %v22, 4294901760
    %613 = vmatpush1.msra.mxu0 %v612
    %614 = vmatprep.subr.mxu0 0.0
    %v615 = vand.u32 %v23, 4294901760
    %616 = vmatpush1.msra.mxu0 %v615
    %617 = vmatprep.subr.mxu0 0.0
    %v618 = vand.u32 %v24, 4294901760
    %619 = vmatpush1.msra.mxu0 %v618
    %620 = vmatprep.subr.mxu0 0.0
    %v621 = vand.u32 %v25, 4294901760
    %622 = vmatpush1.msra.mxu0 %v621
    %623 = vmatprep.subr.mxu0 0.0
    %v624 = vand.u32 %v26, 4294901760
    %625 = vmatpush1.msra.mxu0 %v624
    %626 = vmatprep.subr.mxu0 0.0
    %v627 = vand.u32 %v27, 4294901760
    %628 = vmatpush1.msra.mxu0 %v627
    %629 = vmatprep.subr.mxu0 0.0
    %v630 = vand.u32 %v28, 4294901760
    %631 = vmatpush1.msra.mxu0 %v630
    %632 = vmatprep.subr.mxu0 0.0
    %v633 = vand.u32 %v29, 4294901760
    %634 = vmatpush1.msra.mxu0 %v633
    %635 = vmatprep.subr.mxu0 0.0
    %v636 = vand.u32 %v30, 4294901760
    %637 = vmatpush1.msra.mxu0 %v636
    %638 = vmatprep.subr.mxu0 0.0
    %v639 = vand.u32 %v31, 4294901760
    %640 = vmatpush1.msra.mxu0 %v639
    %641 = vmatprep.subr.mxu0 0.0
    %642 = vmatpush1.msra.mxu0 0.0
    %643 = vmatprep.subr.mxu0 0.0
    %644 = vmatpush1.msra.mxu0 0.0
    %645 = vmatprep.subr.mxu0 0.0
    %646 = vmatpush1.msra.mxu0 0.0
    %647 = vmatprep.subr.mxu0 0.0
    %648 = vmatpush1.msra.mxu0 0.0
    %649 = vmatprep.subr.mxu0 0.0
    %650 = vmatpush1.msra.mxu0 0.0
    %651 = vmatprep.subr.mxu0 0.0
    %652 = vmatpush1.msra.mxu0 0.0
    %653 = vmatprep.subr.mxu0 0.0
    %654 = vmatpush1.msra.mxu0 0.0
    %655 = vmatprep.subr.mxu0 0.0
    %656 = vmatpush1.msra.mxu0 0.0
    %657 = vmatprep.subr.mxu0 0.0
    %658 = vmatpush1.msra.mxu0 0.0
    %659 = vmatprep.subr.mxu0 0.0
    %660 = vmatpush1.msra.mxu0 0.0
    %661 = vmatprep.subr.mxu0 0.0
    %662 = vmatpush1.msra.mxu0 0.0
    %663 = vmatprep.subr.mxu0 0.0
    %664 = vmatpush1.msra.mxu0 0.0
    %665 = vmatprep.subr.mxu0 0.0
    %666 = vmatpush1.msra.mxu0 0.0
    %667 = vmatprep.subr.mxu0 0.0
    %668 = vmatpush1.msra.mxu0 0.0
    %669 = vmatprep.subr.mxu0 0.0
    %670 = vmatpush1.msra.mxu0 0.0
    %671 = vmatprep.subr.mxu0 0.0
    %672 = vmatpush1.msra.mxu0 0.0
    %673 = vmatprep.mubr.f32.mxu0 0.0
    %v674 = vand.u32 %v15, 4294901760
    %675 = vmatmul.mubr.f32.gmra.mrb[0].mxu0 %v674
    %v676 = vpop.f32.mrb[0].mxu0
    %v677 = vadd.f32 %v590, %v676
    %v678 = vpop.f32.mrb[0].mxu0
    %679 = vdwg.mxu0
    %vm680 = vcmask 125952
    %681 = vst.msk [vmem:[#allocation2] sm:$0xf] %vm680, %v677
    // Predicated region
    $region14: #{tpu_custom_call.1} parent=1 // pred_check
      _
    $region15: #{tpu_custom_call.1} parent=1 // pred_check_branch
      %683 = sbr.rel (0) target = $region17
    $region16: #{tpu_custom_call.1} parent=1 // pred_region
      %s685 = ssub.s32 64, 64
      %686 = vsyncadd [#allocation3], %s685
      %s688 = sshll.u32 [#allocation2], 4
      %s689 = int_to_ptr.vmem [resolvable:$true] %s688
      %691 = dma.vmem_to_hbm [thread:$0]  %s689, 64, %s3, [#allocation3]
    $region17: #{tpu_custom_call.1} parent=1 // pred_fallthru
      _
    // Predicated region
    $region18: #{tpu_custom_call.1} parent=1 // pred_check
      _
    $region19: #{tpu_custom_call.1} parent=1 // pred_check_branch
      %693 = sbr.rel (0) target = $region21
    $region20: #{tpu_custom_call.1} parent=1 // pred_region
      %694 = dma.done [#allocation3], 64
    $region21: #{tpu_custom_call.1} parent=1 // pred_fallthru
      _
    %695 = vsyncpa [#allocation3], 1

</llo_original>
